<compile_context>
chip_gen: v6e
topology: v6e:2x2x1
jax: 0.10.0
libtpu: 0.0.40
codegen_flags: <defaults>
</compile_context>

<pallas_src>
import functools

import jax
import jax.numpy as jnp
from jax import lax
from jax.experimental import pallas as pl
from jax.experimental.pallas import tpu as pltpu


def _sdpa_kernel(x_ref, y_ref, mask_ref, drop_ref, o_ref, *, inv_sqrt_k):
    """One (batch, S-tile) step."""
    x = x_ref[...]                               # (TS, D)  input dtype
    y = y_ref[...]                               # (K,  D)  input dtype
    m = mask_ref[...].astype(jnp.float32)        # (TS, K)
    d = drop_ref[...]                            # (TS, K)  pre-scaled keep/(1-p)

    # qk[s,k] = sum_d x[s,d] * y[k,d]   -> MXU contraction, f32 accumulate
    qk = lax.dot_general(
        x, y, (((1,), (1,)), ((), ())), preferred_element_type=jnp.float32)

    # scale_factor = attn_mask / sqrt(K); fold 1/sqrt(K) into one scalar multiply
    scaled = (qk * m) * inv_sqrt_k

    # numerically-stable softmax along K (lanes)
    s_max = jnp.max(scaled, axis=-1, keepdims=True)
    e = jnp.exp(scaled - s_max)
    probs = e * (1.0 / jnp.sum(e, axis=-1, keepdims=True))

    # dropout: multiplier already contains 0 or 1/(1-p)
    probs = probs * d

    # out[s,d] = sum_k probs[s,k] * y[k,d]   -> MXU contraction, f32 accumulate
    out = lax.dot_general(
        probs.astype(y.dtype), y, (((1,), (0,)), ((), ())),
        preferred_element_type=jnp.float32)

    o_ref[...] = (out + x.astype(jnp.float32)).astype(o_ref.dtype)


def _choose_tile_s(S):
    if S <= 512:
        return S
    for t in (512, 256, 128, 64, 32, 16, 8):
        if S % t == 0:
            return t
    return S


def sdpa_pallas(x, y, attn_mask, dropout_p, seed=0):
    B, S, D = x.shape
    _, K, _ = y.shape
    assert y.shape == (B, K, D)
    assert attn_mask.shape == (B, S, K)

    p = float(dropout_p)
    if p <= 0.0:
        drop = jnp.ones((B, S, K), dtype=jnp.float32)
    elif p >= 1.0:
        drop = jnp.zeros((B, S, K), dtype=jnp.float32)
    else:
        keep = jax.random.bernoulli(jax.random.PRNGKey(seed), 1.0 - p, (B, S, K))
        drop = keep.astype(jnp.float32) * (1.0 / (1.0 - p))

    tile_s = _choose_tile_s(S)
    grid = (B, pl.cdiv(S, tile_s))

    kernel = functools.partial(_sdpa_kernel, inv_sqrt_k=1.0 / (float(K) ** 0.5))

    itemsize = x.dtype.itemsize
    bytes_accessed = (
        x.size * itemsize            # x in
        + y.size * y.dtype.itemsize  # y in
        + attn_mask.size * attn_mask.dtype.itemsize
        + drop.size * 4              # dropout multiplier in
        + x.size * itemsize          # out
    )

    return pl.pallas_call(
        kernel,
        out_shape=jax.ShapeDtypeStruct((B, S, D), x.dtype),
        grid=grid,
        in_specs=[
            pl.BlockSpec((None, tile_s, D), lambda b, s: (b, s, 0)),  # x tile
            pl.BlockSpec((None, K, D), lambda b, s: (b, 0, 0)),       # y (resident)
            pl.BlockSpec((None, tile_s, K), lambda b, s: (b, s, 0)),  # attn_mask tile
            pl.BlockSpec((None, tile_s, K), lambda b, s: (b, s, 0)),  # dropout tile
        ],
        out_specs=pl.BlockSpec((None, tile_s, D), lambda b, s: (b, s, 0)),
        compiler_params=pltpu.CompilerParams(
            dimension_semantics=("parallel", "parallel")),
        cost_estimate=pl.CostEstimate(
            flops=4 * B * S * K * D + 6 * B * S * K,
            transcendentals=B * S * K,
            bytes_accessed=bytes_accessed),
    )(x, y, attn_mask, drop)


def sdpa_reference(x, y, attn_mask):
    """Pure-JAX reference (dropout p=0)."""
    K = y.shape[-2]
    qk = jnp.matmul(x, jnp.swapaxes(y, -2, -1))
    scale = attn_mask.astype(jnp.float32) / (float(K) ** 0.5)
    probs = jax.nn.softmax(qk * scale, axis=-1)
    return jnp.matmul(probs, y) + x


if __name__ == "__main__":
    key = jax.random.PRNGKey(0)
    kx, ky, km = jax.random.split(key, 3)

    # shapes implied by the module's globals: x (1,5,1), y (1,2,1), attn_mask (1,5,2)
    x = jax.random.normal(kx, (1, 5, 1), dtype=jnp.float32)
    y = jax.random.normal(ky, (1, 2, 1), dtype=jnp.float32)
    attn_mask = jax.random.normal(km, (1, 5, 2), dtype=jnp.float32)

    # dropout p = 0.0: exact check against the pure-JAX reference
    out = sdpa_pallas(x, y, attn_mask, dropout_p=0.0)
    out = jax.block_until_ready(out)
    ref = sdpa_reference(x, y, attn_mask)
    assert out.shape == (1, 5, 1)
    assert jnp.allclose(out, ref, atol=1e-5, rtol=1e-5), "mismatch vs reference"

    # dropout p > 0: exercise the dropout path (stochastic; shape/run check only)
    out_p = sdpa_pallas(x, y, attn_mask, dropout_p=0.25, seed=123)
    out_p = jax.block_until_ready(out_p)
    assert out_p.shape == (1, 5, 1)

    print("KERNEL_OK")
</pallas_src>

<mosaic_0001>
module attributes {stable_mosaic.version = 11 : i64} {
  func.func @_sdpa_kernel(%arg0: i32, %arg1: i32, %arg2: memref<1x5x1xf32, #tpu.memory_space<vmem>>, %arg3: memref<1x2x1xf32, #tpu.memory_space<vmem>>, %arg4: memref<1x5x2xf32, #tpu.memory_space<vmem>>, %arg5: memref<1x5x2xf32, #tpu.memory_space<vmem>>, %arg6: memref<1x5x1xf32, #tpu.memory_space<vmem>>) attributes {dimension_semantics = [#tpu.dimension_semantics<parallel>, #tpu.dimension_semantics<parallel>], iteration_bounds = array<i64: 1, 1>, scalar_prefetch = 0 : i64, scratch_operands = 0 : i64, tpu.core_type = #tpu.core_type<tc>, window_params = [{transform_indices = @transform_0, window_bounds = array<i64: 1, 5, 1>}, {transform_indices = @transform_1, window_bounds = array<i64: 1, 2, 1>}, {transform_indices = @transform_2, window_bounds = array<i64: 1, 5, 2>}, {transform_indices = @transform_3, window_bounds = array<i64: 1, 5, 2>}, {transform_indices = @transform_4, window_bounds = array<i64: 1, 5, 1>}]} {
    %c0 = arith.constant 0 : index
    %c0_0 = arith.constant 0 : index
    %c0_1 = arith.constant 0 : index
    %0 = vector.load %arg2[%c0, %c0_0, %c0_1] : memref<1x5x1xf32, #tpu.memory_space<vmem>>, vector<1x5x1xf32>
    %1 = vector.shape_cast %0 : vector<1x5x1xf32> to vector<5x1xf32>
    %c0_2 = arith.constant 0 : index
    %c0_3 = arith.constant 0 : index
    %c0_4 = arith.constant 0 : index
    %2 = vector.load %arg3[%c0_2, %c0_3, %c0_4] : memref<1x2x1xf32, #tpu.memory_space<vmem>>, vector<1x2x1xf32>
    %3 = vector.shape_cast %2 : vector<1x2x1xf32> to vector<2x1xf32>
    %c0_5 = arith.constant 0 : index
    %c0_6 = arith.constant 0 : index
    %c0_7 = arith.constant 0 : index
    %4 = vector.load %arg4[%c0_5, %c0_6, %c0_7] : memref<1x5x2xf32, #tpu.memory_space<vmem>>, vector<1x5x2xf32>
    %5 = vector.shape_cast %4 : vector<1x5x2xf32> to vector<5x2xf32>
    %c0_8 = arith.constant 0 : index
    %c0_9 = arith.constant 0 : index
    %c0_10 = arith.constant 0 : index
    %6 = vector.load %arg5[%c0_8, %c0_9, %c0_10] : memref<1x5x2xf32, #tpu.memory_space<vmem>>, vector<1x5x2xf32>
    %7 = vector.shape_cast %6 : vector<1x5x2xf32> to vector<5x2xf32>
    %cst = arith.constant dense<0.000000e+00> : vector<5x2xf32>
    %8 = tpu.matmul %1, %3, %cst {dimension_numbers = #tpu.dot_dimension_numbers<[1], [1], [0], [0], [0, 0, 1, 0], [], []>} : vector<5x1xf32>, vector<2x1xf32>, vector<5x2xf32> -> vector<5x2xf32>
    %9 = arith.mulf %8, %5 : vector<5x2xf32>
    %cst_11 = arith.constant 0.707106769 : f32
    %10 = vector.broadcast %cst_11 : f32 to vector<5x2xf32>
    %11 = arith.mulf %9, %10 : vector<5x2xf32>
    %cst_12 = arith.constant dense<0xFF800000> : vector<5xf32>
    %12 = vector.multi_reduction <maximumf>, %11, %cst_12 [1] : vector<5x2xf32> to vector<5xf32>
    %13 = vector.shape_cast %12 : vector<5xf32> to vector<5x1xf32>
    %14 = vector.broadcast %13 : vector<5x1xf32> to vector<5x2xf32>
    %15 = arith.subf %11, %14 : vector<5x2xf32>
    %16 = math.exp %15 : vector<5x2xf32>
    %cst_13 = arith.constant dense<0.000000e+00> : vector<5xf32>
    %17 = vector.multi_reduction <add>, %16, %cst_13 [1] : vector<5x2xf32> to vector<5xf32>
    %18 = vector.shape_cast %17 : vector<5xf32> to vector<5x1xf32>
    %cst_14 = arith.constant 1.000000e+00 : f32
    %19 = vector.broadcast %cst_14 : f32 to vector<5x1xf32>
    %20 = arith.divf %19, %18 : vector<5x1xf32>
    %21 = vector.broadcast %20 : vector<5x1xf32> to vector<5x2xf32>
    %22 = arith.mulf %16, %21 : vector<5x2xf32>
    %23 = arith.mulf %22, %7 : vector<5x2xf32>
    %cst_15 = arith.constant dense<0.000000e+00> : vector<5x1xf32>
    %24 = tpu.matmul %23, %3, %cst_15 {dimension_numbers = #tpu.dot_dimension_numbers<[1], [0], [0], [1], [0, 0, 1, 1], [], []>} : vector<5x2xf32>, vector<2x1xf32>, vector<5x1xf32> -> vector<5x1xf32>
    %25 = arith.addf %24, %1 : vector<5x1xf32>
    %c0_16 = arith.constant 0 : index
    %c0_17 = arith.constant 0 : index
    %c0_18 = arith.constant 0 : index
    %26 = vector.load %arg6[%c0_16, %c0_17, %c0_18] : memref<1x5x1xf32, #tpu.memory_space<vmem>>, vector<1x5x1xf32>
    %27 = vector.shape_cast %26 : vector<1x5x1xf32> to vector<5x1xf32>
    %28 = vector.shape_cast %25 : vector<5x1xf32> to vector<1x5x1xf32>
    tpu.vector_store %arg6[%c0_16, %c0_17, %c0_18], %28 {strides = array<i32>} : memref<1x5x1xf32, #tpu.memory_space<vmem>>, vector<1x5x1xf32>,
    return
  }
  func.func @transform_0(%arg0: i32, %arg1: i32) -> (i32, i32, i32) {
    %c0_i32 = arith.constant 0 : i32
    %c0_i32_0 = arith.constant 0 : i32
    return %arg0, %arg1, %c0_i32 : i32, i32, i32
  }
  func.func @transform_1(%arg0: i32, %arg1: i32) -> (i32, i32, i32) {
    %c0_i32 = arith.constant 0 : i32
    %c0_i32_0 = arith.constant 0 : i32
    %c0_i32_1 = arith.constant 0 : i32
    return %arg0, %c0_i32, %c0_i32_0 : i32, i32, i32
  }
  func.func @transform_2(%arg0: i32, %arg1: i32) -> (i32, i32, i32) {
    %c0_i32 = arith.constant 0 : i32
    %c0_i32_0 = arith.constant 0 : i32
    return %arg0, %arg1, %c0_i32 : i32, i32, i32
  }
  func.func @transform_3(%arg0: i32, %arg1: i32) -> (i32, i32, i32) {
    %c0_i32 = arith.constant 0 : i32
    %c0_i32_0 = arith.constant 0 : i32
    return %arg0, %arg1, %c0_i32 : i32, i32, i32
  }
  func.func @transform_4(%arg0: i32, %arg1: i32) -> (i32, i32, i32) {
    %c0_i32 = arith.constant 0 : i32
    %c0_i32_0 = arith.constant 0 : i32
    return %arg0, %arg1, %c0_i32 : i32, i32, i32
  }
}

</mosaic_0001>

<llo_original>
// kernel: tpu_custom_call.1
$region0: #{tpu_custom_call.1}
  #allocation0 [shape = 'u32[]', space=smem, size = 0x4, offset = 0x4, fixed_abs, tag = 'smem constant byte address 0x4 - core index']
  #allocation1 [shape = 'u32[144,128]{1,0:T(1,128)}', space=vmem, size = 0x12000, scoped, tag = 'internal scratch']
  %s0 = inlined_call_operand.vmem [shape: f32[1,5,1], index: 0, kind: input, shape index: {}]
  %s1 = inlined_call_operand.vmem [shape: f32[1,2,1], index: 1, kind: input, shape index: {}]
  %s2 = inlined_call_operand.vmem [shape: f32[1,5,2], index: 2, kind: input, shape index: {}]
  %s3 = inlined_call_operand.vmem [shape: f32[1,5,2], index: 3, kind: input, shape index: {}]
  %s4 = inlined_call_operand.vmem [shape: f32[1,5,1], index: 4, kind: output, shape index: {}]
  %s5 = sld [smem:[#allocation0]]
  $region26: #{tpu_custom_call.1} parent=0
    _
  %s7 = ssub.s32 1, %s5
  %s8 = scalar_select 0, %s7, %s5
  // Predicated region
  $region2: #{tpu_custom_call.1} parent=0 // pred_check
    _
  $region3: #{tpu_custom_call.1} parent=0 // pred_check_branch
    %10 = sbr.rel (0) target = $region5
  $region4: #{tpu_custom_call.1} parent=0 // pred_region
    _
  $region5: #{tpu_custom_call.1} parent=0 // pred_fallthru
    _
  // Predicated region
  $region6: #{tpu_custom_call.1} parent=0 // pred_check
    _
  $region7: #{tpu_custom_call.1} parent=0 // pred_check_branch
    %12 = sbr.rel (0) target = $region9
  $region8: #{tpu_custom_call.1} parent=0 // pred_region
    _
  $region9: #{tpu_custom_call.1} parent=0 // pred_fallthru
    _
  // Predicated region
  $region10: #{tpu_custom_call.1} parent=0 // pred_check
    _
  $region11: #{tpu_custom_call.1} parent=0 // pred_check_branch
    %14 = sbr.rel (0) target = $region13
  $region12: #{tpu_custom_call.1} parent=0 // pred_region
    _
  $region13: #{tpu_custom_call.1} parent=0 // pred_fallthru
    _
  // Predicated region
  $region14: #{tpu_custom_call.1} parent=0 // pred_check
    _
  $region15: #{tpu_custom_call.1} parent=0 // pred_check_branch
    %16 = sbr.rel (0) target = $region17
  $region16: #{tpu_custom_call.1} parent=0 // pred_region
    _
  $region17: #{tpu_custom_call.1} parent=0 // pred_fallthru
    _
  %v17 = vld [vmem:[%s0] sm:$0x1f]
  %v18 = vld [vmem:[%s1] sm:$0x3]
  %v19 = vld [vmem:[%s2] sm:$0x1f]
  %v20 = vld [vmem:[%s3] sm:$0x1f]
  %vm21 = vcmask 7168
  %v23 = vsel %vm21, %v17, 0
  %v26 = vsel %vm21, %v18, 0
  %28 = vmatprep.subr.mxu0 0.0
  %29 = vmatpush1.xpose.msra.mxu0 0.0
  %30 = vmatprep.subr.mxu0 0.0
  %31 = vmatpush1.xpose.msra.mxu0 0.0
  %32 = vmatprep.subr.mxu0 0.0
  %33 = vmatpush1.xpose.msra.mxu0 0.0
  %34 = vmatprep.subr.mxu0 0.0
  %35 = vmatpush1.xpose.msra.mxu0 0.0
  %36 = vmatprep.subr.mxu0 0.0
  %37 = vmatpush1.xpose.msra.mxu0 0.0
  %38 = vmatprep.subr.mxu0 0.0
  %39 = vmatpush1.xpose.msra.mxu0 0.0
  %40 = vmatprep.subr.mxu0 0.0
  %41 = vmatpush1.xpose.msra.mxu0 0.0
  %42 = vmatprep.subr.mxu0 0.0
  %43 = vmatpush1.xpose.msra.mxu0 0.0
  %44 = vmatprep.subr.mxu0 0.0
  %45 = vmatpush1.xpose.msra.mxu0 0.0
  %46 = vmatprep.subr.mxu0 0.0
  %47 = vmatpush1.xpose.msra.mxu0 0.0
  %48 = vmatprep.subr.mxu0 0.0
  %49 = vmatpush1.xpose.msra.mxu0 0.0
  %50 = vmatprep.subr.mxu0 0.0
  %51 = vmatpush1.xpose.msra.mxu0 0.0
  %52 = vmatprep.subr.mxu0 0.0
  %53 = vmatpush1.xpose.msra.mxu0 0.0
  %54 = vmatprep.subr.mxu0 0.0
  %55 = vmatpush1.xpose.msra.mxu0 0.0
  %56 = vmatprep.subr.mxu0 0.0
  %57 = vmatpush1.xpose.msra.mxu0 0.0
  %58 = vmatprep.subr.mxu0 0.0
  %59 = vmatpush1.xpose.msra.mxu0 %v26
  %60 = vmatprep.subr.mxu0 0.0
  %61 = vmatpush2.xpose.msra.mxu0 0.0
  %62 = vmatprep.subr.mxu0 0.0
  %63 = vmatpush2.xpose.msra.mxu0 0.0
  %64 = vmatprep.subr.mxu0 0.0
  %65 = vmatpush2.xpose.msra.mxu0 0.0
  %66 = vmatprep.subr.mxu0 0.0
  %67 = vmatpush2.xpose.msra.mxu0 0.0
  %68 = vmatprep.subr.mxu0 0.0
  %69 = vmatpush2.xpose.msra.mxu0 0.0
  %70 = vmatprep.subr.mxu0 0.0
  %71 = vmatpush2.xpose.msra.mxu0 0.0
  %72 = vmatprep.subr.mxu0 0.0
  %73 = vmatpush2.xpose.msra.mxu0 0.0
  %74 = vmatprep.subr.mxu0 0.0
  %75 = vmatpush2.xpose.msra.mxu0 0.0
  %76 = vmatprep.subr.mxu0 0.0
  %77 = vmatpush2.xpose.msra.mxu0 0.0
  %78 = vmatprep.subr.mxu0 0.0
  %79 = vmatpush2.xpose.msra.mxu0 0.0
  %80 = vmatprep.subr.mxu0 0.0
  %81 = vmatpush2.xpose.msra.mxu0 0.0
  %82 = vmatprep.subr.mxu0 0.0
  %83 = vmatpush2.xpose.msra.mxu0 0.0
  %84 = vmatprep.subr.mxu0 0.0
  %85 = vmatpush2.xpose.msra.mxu0 0.0
  %86 = vmatprep.subr.mxu0 0.0
  %87 = vmatpush2.xpose.msra.mxu0 0.0
  %88 = vmatprep.subr.mxu0 0.0
  %89 = vmatpush2.xpose.msra.mxu0 0.0
  %90 = vmatprep.subr.mxu0 0.0
  %91 = vmatpush2.xpose.msra.mxu0 0.0
  %92 = vmatprep.mubr.f32.mxu0 0.0
  %93 = vmatmul.mubr.f32.gmra.mxu0 %v23
  %v94 = vpop.f32.mrf.mxu0
  %v95 = vadd.f32 0.0, %v94
  %v96 = vpop.f32.mrf.mxu0
  %97 = vdwg.mxu0
  %v98 = vmul.f32 %v95, %v19
  %v99 = vmul.f32 %v98, 0.70710677
  %vm100 = vcmask 12288
  %v101 = vsel %vm100, %v99, -inf
  %102 = vmax.xlane.f32.xlu0 %v101
  %v103 = vpop.xlane.xlu0 %102
  %v104 = vsub.f32 %v99, %v103
  %v105 = vmul.f32 %v104, 1.442695
  %v106 = vpow.pop %v105
  %v107 = vsel %vm100, %v106, 0.0
  %108 = vadd.xlane.f32.xlu0 %v107
  %v109 = vpop.xlane.xlu0 %108
  %v110 = vrcp.pop %v109
  %v111 = vmul.f32 1.0, %v110
  %v112 = vmul.f32 %v106, %v111
  %v113 = vmul.f32 %v112, %v20
  %vm114 = vcmask 15360
  %v116 = vsel %vm114, %v113, 0
  %vm118 = vcmask 1041408
  %v119 = vsel %vm118, %v18, 0
  %121 = vmatprep.subr.mxu0 0.0
  %122 = vmatpush1.msra.mxu0 0.0
  %123 = vmatprep.subr.mxu0 0.0
  %124 = vmatpush1.msra.mxu0 0.0
  %125 = vmatprep.subr.mxu0 0.0
  %126 = vmatpush1.msra.mxu0 0.0
  %127 = vmatprep.subr.mxu0 0.0
  %128 = vmatpush1.msra.mxu0 0.0
  %129 = vmatprep.subr.mxu0 0.0
  %130 = vmatpush1.msra.mxu0 0.0
  %131 = vmatprep.subr.mxu0 0.0
  %132 = vmatpush1.msra.mxu0 0.0
  %133 = vmatprep.subr.mxu0 0.0
  %134 = vmatpush1.msra.mxu0 0.0
  %135 = vmatprep.subr.mxu0 0.0
  %136 = vmatpush1.msra.mxu0 0.0
  %137 = vmatprep.subr.mxu0 0.0
  %138 = vmatpush1.msra.mxu0 0.0
  %139 = vmatprep.subr.mxu0 0.0
  %140 = vmatpush1.msra.mxu0 0.0
  %141 = vmatprep.subr.mxu0 0.0
  %142 = vmatpush1.msra.mxu0 0.0
  %143 = vmatprep.subr.mxu0 0.0
  %144 = vmatpush1.msra.mxu0 0.0
  %145 = vmatprep.subr.mxu0 0.0
  %146 = vmatpush1.msra.mxu0 0.0
  %147 = vmatprep.subr.mxu0 0.0
  %148 = vmatpush1.msra.mxu0 0.0
  %149 = vmatprep.subr.mxu0 0.0
  %150 = vmatpush1.msra.mxu0 0.0
  %151 = vmatprep.subr.mxu0 0.0
  %152 = vmatpush1.msra.mxu0 %v119
  %153 = vmatprep.subr.mxu0 0.0
  %154 = vmatpush2.msra.mxu0 0.0
  %155 = vmatprep.subr.mxu0 0.0
  %156 = vmatpush2.msra.mxu0 0.0
  %157 = vmatprep.subr.mxu0 0.0
  %158 = vmatpush2.msra.mxu0 0.0
  %159 = vmatprep.subr.mxu0 0.0
  %160 = vmatpush2.msra.mxu0 0.0
  %161 = vmatprep.subr.mxu0 0.0
  %162 = vmatpush2.msra.mxu0 0.0
  %163 = vmatprep.subr.mxu0 0.0
  %164 = vmatpush2.msra.mxu0 0.0
  %165 = vmatprep.subr.mxu0 0.0
  %166 = vmatpush2.msra.mxu0 0.0
  %167 = vmatprep.subr.mxu0 0.0
  %168 = vmatpush2.msra.mxu0 0.0
  %169 = vmatprep.subr.mxu0 0.0
  %170 = vmatpush2.msra.mxu0 0.0
  %171 = vmatprep.subr.mxu0 0.0
  %172 = vmatpush2.msra.mxu0 0.0
  %173 = vmatprep.subr.mxu0 0.0
  %174 = vmatpush2.msra.mxu0 0.0
  %175 = vmatprep.subr.mxu0 0.0
  %176 = vmatpush2.msra.mxu0 0.0
  %177 = vmatprep.subr.mxu0 0.0
  %178 = vmatpush2.msra.mxu0 0.0
  %179 = vmatprep.subr.mxu0 0.0
  %180 = vmatpush2.msra.mxu0 0.0
  %181 = vmatprep.subr.mxu0 0.0
  %182 = vmatpush2.msra.mxu0 0.0
  %183 = vmatprep.subr.mxu0 0.0
  %184 = vmatpush2.msra.mxu0 0.0
  %185 = vmatprep.mubr.f32.mxu0 0.0
  %186 = vmatmul.mubr.f32.gmra.mxu0 %v116
  %v187 = vpop.f32.mrf.mxu0
  %v188 = vadd.f32 %v17, %v187
  %v189 = vpop.f32.mrf.mxu0
  %190 = vdwg.mxu0
  %vm191 = vcmask 4096
  %192 = vst.msk [vmem:[%s4] sm:$0x1f] %vm191, %v188
  // Predicated region
  $region18: #{tpu_custom_call.1} parent=0 // pred_check
    _
  $region19: #{tpu_custom_call.1} parent=0 // pred_check_branch
    %194 = sbr.rel (0) target = $region21
  $region20: #{tpu_custom_call.1} parent=0 // pred_region
    _
  $region21: #{tpu_custom_call.1} parent=0 // pred_fallthru
    _
  // Predicated region
  $region22: #{tpu_custom_call.1} parent=0 // pred_check
    _
  $region23: #{tpu_custom_call.1} parent=0 // pred_check_branch
    %196 = sbr.rel (0) target = $region25
  $region24: #{tpu_custom_call.1} parent=0 // pred_region
    _
  $region25: #{tpu_custom_call.1} parent=0 // pred_fallthru
    _

</llo_original>
